<compile_context>
chip_gen: v7x
topology: tpu7x:2x2x1
jax: 0.10.0
libtpu: 0.0.40
codegen_flags: <defaults>
</compile_context>

<pallas_src>
import jax
import jax.numpy as jnp
from jax.experimental import pallas as pl
from jax.experimental.pallas import tpu as pltpu

LANE = 128
SUBLANE = 8


def _round_up(v, m):
    return ((v + m - 1) // m) * m


def mlp_kernel(x_ref, w1_ref, b1_ref, w2_ref, b2_ref, out_ref):
    # x_ref : (TN, Fp)  bf16 tile of node features
    # w1_ref: (Fp, Hp)  bf16        b1_ref: (1, Hp) f32
    # w2_ref: (Hp, Cp)  bf16        b2_ref: (1, Cp) f32
    # out_ref: (TN, Cp) f32 (lane-dense, Cp = 128)
    x = x_ref[...]
    h = jnp.dot(x, w1_ref[...], preferred_element_type=jnp.float32)
    h = h + b1_ref[...]                       # broadcast (1, Hp) -> (TN, Hp), f32
    h = jnp.maximum(h, 0.0)                   # ReLU in f32
    # dropout(p=0.5, training=False) -> identity
    h = h.astype(w2_ref.dtype)                # back to bf16 for the second MXU pass
    o = jnp.dot(h, w2_ref[...], preferred_element_type=jnp.float32)
    o = o + b2_ref[...]                       # broadcast (1, Cp) -> (TN, Cp), f32
    out_ref[...] = o.astype(out_ref.dtype)


def mlp_forward(x, w1, b1, w2, b2, *, tile_n=None, compute_dtype=jnp.bfloat16):
    """x:(N,F) f32; w1:(F,H); b1:(1,H); w2:(H,C); b2:(1,C).  Returns (N,C) f32."""
    N, F = x.shape
    H = w1.shape[1]
    C = w2.shape[1]

    # Lane-dense padded sizes.
    Fp = _round_up(F, LANE)
    Hp = _round_up(H, LANE)
    Cp = _round_up(C, LANE)

    if tile_n is None:
        # >=2 grid blocks so v7x can use both TensorCores; cap tile at 512 rows so
        # the per-step working set stays far below the v7x 64 MiB VMEM budget.
        tile_n = min(512, max(SUBLANE, _round_up(-(-N // 2), SUBLANE)))
    Np = _round_up(N, tile_n)

    # Zero-padded, dtype-cast operands (padding contributes exact zeros to the result).
    xp = jnp.zeros((Np, Fp), compute_dtype).at[:N, :F].set(x.astype(compute_dtype))
    w1p = jnp.zeros((Fp, Hp), compute_dtype).at[:F, :H].set(w1.astype(compute_dtype))
    b1p = jnp.zeros((1, Hp), jnp.float32).at[:, :H].set(b1.astype(jnp.float32))
    w2p = jnp.zeros((Hp, Cp), compute_dtype).at[:H, :C].set(w2.astype(compute_dtype))
    b2p = jnp.zeros((1, Cp), jnp.float32).at[:, :C].set(b2.astype(jnp.float32))

    grid = (Np // tile_n,)
    out_padded = pl.pallas_call(
        mlp_kernel,
        out_shape=jax.ShapeDtypeStruct((Np, Cp), jnp.float32),
        grid_spec=pltpu.PrefetchScalarGridSpec(
            num_scalar_prefetch=0,
            grid=grid,
            in_specs=[
                pl.BlockSpec((tile_n, Fp), lambda i: (i, 0)),   # x tile (streams over N)
                pl.BlockSpec((Fp, Hp), lambda i: (0, 0)),       # w1 (resident)
                pl.BlockSpec((1, Hp), lambda i: (0, 0)),        # b1 (resident)
                pl.BlockSpec((Hp, Cp), lambda i: (0, 0)),       # w2 (resident)
                pl.BlockSpec((1, Cp), lambda i: (0, 0)),        # b2 (resident)
            ],
            out_specs=pl.BlockSpec((tile_n, Cp), lambda i: (i, 0)),
        ),
        compiler_params=pltpu.CompilerParams(
            dimension_semantics=("parallel",),
            # VMEM use is tiny at these shapes; leave the default scoped limit.
        ),
    )(xp, w1p, b1p, w2p, b2p)

    return out_padded[:N, :C]


def init_params(key, num_features, hidden_channels, num_classes):
    # Mimic torch.nn.Linear defaults: U(-1/sqrt(fan_in), 1/sqrt(fan_in)).
    k1, k2, k3, k4 = jax.random.split(key, 4)
    bound1 = 1.0 / (num_features ** 0.5)
    bound2 = 1.0 / (hidden_channels ** 0.5)
    # Stored pre-transposed vs. PyTorch Linear: (in, out).
    w1 = jax.random.uniform(k1, (num_features, hidden_channels),
                            jnp.float32, -bound1, bound1)
    b1 = jax.random.uniform(k2, (1, hidden_channels),
                            jnp.float32, -bound1, bound1)
    w2 = jax.random.uniform(k3, (hidden_channels, num_classes),
                            jnp.float32, -bound2, bound2)
    b2 = jax.random.uniform(k4, (1, num_classes),
                            jnp.float32, -bound2, bound2)
    return w1, b1, w2, b2


if __name__ == "__main__":
    # Small, Cora-like synthetic shapes: N nodes, F features, H hidden, C classes.
    N, F, H, C = 128, 256, 32, 7

    key = jax.random.PRNGKey(0)
    kx, kp = jax.random.split(key)
    x = jax.random.normal(kx, (N, F), jnp.float32)
    w1, b1, w2, b2 = init_params(kp, F, H, C)

    out = mlp_forward(x, w1, b1, w2, b2)
    out = jax.block_until_ready(out)
    assert out.shape == (N, C)

    # Reference in plain JAX, mirroring the kernel's bf16 operand rounding
    # (both paths accumulate in f32; only summation order differs).
    xb = x.astype(jnp.bfloat16).astype(jnp.float32)
    w1b = w1.astype(jnp.bfloat16).astype(jnp.float32)
    w2b = w2.astype(jnp.bfloat16).astype(jnp.float32)
    h_ref = jnp.maximum(xb @ w1b + b1, 0.0)
    h_ref = h_ref.astype(jnp.bfloat16).astype(jnp.float32)
    ref = h_ref @ w2b + b2
    assert jnp.allclose(out, ref, atol=2e-2, rtol=2e-2), (
        float(jnp.max(jnp.abs(out - ref))))

    print("KERNEL_OK")
</pallas_src>

<mosaic_0001>
module attributes {stable_mosaic.version = 11 : i64} {
  func.func @mlp_kernel(%arg0: i32, %arg1: memref<64x256xbf16, #tpu.memory_space<vmem>>, %arg2: memref<256x128xbf16, #tpu.memory_space<vmem>>, %arg3: memref<1x128xf32, #tpu.memory_space<vmem>>, %arg4: memref<128x128xbf16, #tpu.memory_space<vmem>>, %arg5: memref<1x128xf32, #tpu.memory_space<vmem>>, %arg6: memref<64x128xf32, #tpu.memory_space<vmem>>) attributes {dimension_semantics = [#tpu.dimension_semantics<parallel>], iteration_bounds = array<i64: 2>, scalar_prefetch = 0 : i64, scratch_operands = 0 : i64, tpu.core_type = #tpu.core_type<tc>, window_params = [{transform_indices = @transform_0, window_bounds = array<i64: 64, 256>}, {pipeline_mode = #tpu.pipeline_mode<synchronous>, transform_indices = @transform_1, window_bounds = array<i64: 256, 128>}, {pipeline_mode = #tpu.pipeline_mode<synchronous>, transform_indices = @transform_2, window_bounds = array<i64: 1, 128>}, {pipeline_mode = #tpu.pipeline_mode<synchronous>, transform_indices = @transform_3, window_bounds = array<i64: 128, 128>}, {pipeline_mode = #tpu.pipeline_mode<synchronous>, transform_indices = @transform_4, window_bounds = array<i64: 1, 128>}, {transform_indices = @transform_5, window_bounds = array<i64: 64, 128>}]} {
    %c0 = arith.constant 0 : index
    %c0_0 = arith.constant 0 : index
    %0 = vector.load %arg1[%c0, %c0_0] : memref<64x256xbf16, #tpu.memory_space<vmem>>, vector<64x256xbf16>
    %c0_1 = arith.constant 0 : index
    %c0_2 = arith.constant 0 : index
    %1 = vector.load %arg2[%c0_1, %c0_2] : memref<256x128xbf16, #tpu.memory_space<vmem>>, vector<256x128xbf16>
    %cst = arith.constant dense<0.000000e+00> : vector<64x128xf32>
    %2 = tpu.matmul %0, %1, %cst {dimension_numbers = #tpu.dot_dimension_numbers<[1], [0], [0], [1], [0, 0, 1, 1], [], []>} : vector<64x256xbf16>, vector<256x128xbf16>, vector<64x128xf32> -> vector<64x128xf32>
    %c0_3 = arith.constant 0 : index
    %c0_4 = arith.constant 0 : index
    %3 = vector.load %arg3[%c0_3, %c0_4] : memref<1x128xf32, #tpu.memory_space<vmem>>, vector<1x128xf32>
    %4 = vector.broadcast %3 : vector<1x128xf32> to vector<64x128xf32>
    %5 = arith.addf %2, %4 : vector<64x128xf32>
    %cst_5 = arith.constant 0.000000e+00 : f32
    %6 = vector.broadcast %cst_5 : f32 to vector<64x128xf32>
    %7 = arith.maximumf %5, %6 : vector<64x128xf32>
    %8 = arith.truncf %7 : vector<64x128xf32> to vector<64x128xbf16>
    %c0_6 = arith.constant 0 : index
    %c0_7 = arith.constant 0 : index
    %9 = vector.load %arg4[%c0_6, %c0_7] : memref<128x128xbf16, #tpu.memory_space<vmem>>, vector<128x128xbf16>
    %cst_8 = arith.constant dense<0.000000e+00> : vector<64x128xf32>
    %10 = tpu.matmul %8, %9, %cst_8 {dimension_numbers = #tpu.dot_dimension_numbers<[1], [0], [0], [1], [0, 0, 1, 1], [], []>} : vector<64x128xbf16>, vector<128x128xbf16>, vector<64x128xf32> -> vector<64x128xf32>
    %c0_9 = arith.constant 0 : index
    %c0_10 = arith.constant 0 : index
    %11 = vector.load %arg5[%c0_9, %c0_10] : memref<1x128xf32, #tpu.memory_space<vmem>>, vector<1x128xf32>
    %12 = vector.broadcast %11 : vector<1x128xf32> to vector<64x128xf32>
    %13 = arith.addf %10, %12 : vector<64x128xf32>
    %c0_11 = arith.constant 0 : index
    %c0_12 = arith.constant 0 : index
    %14 = vector.load %arg6[%c0_11, %c0_12] : memref<64x128xf32, #tpu.memory_space<vmem>>, vector<64x128xf32>
    tpu.vector_store %arg6[%c0_11, %c0_12], %13 {strides = array<i32>} : memref<64x128xf32, #tpu.memory_space<vmem>>, vector<64x128xf32>,
    return
  }
  func.func @transform_0(%arg0: i32) -> (i32, i32) {
    %c0_i32 = arith.constant 0 : i32
    %c0_i32_0 = arith.constant 0 : i32
    return %arg0, %c0_i32 : i32, i32
  }
  func.func @transform_1(%arg0: i32) -> (i32, i32) {
    %c0_i32 = arith.constant 0 : i32
    %c0_i32_0 = arith.constant 0 : i32
    %c0_i32_1 = arith.constant 0 : i32
    return %c0_i32, %c0_i32_0 : i32, i32
  }
  func.func @transform_2(%arg0: i32) -> (i32, i32) {
    %c0_i32 = arith.constant 0 : i32
    %c0_i32_0 = arith.constant 0 : i32
    %c0_i32_1 = arith.constant 0 : i32
    return %c0_i32, %c0_i32_0 : i32, i32
  }
  func.func @transform_3(%arg0: i32) -> (i32, i32) {
    %c0_i32 = arith.constant 0 : i32
    %c0_i32_0 = arith.constant 0 : i32
    %c0_i32_1 = arith.constant 0 : i32
    return %c0_i32, %c0_i32_0 : i32, i32
  }
  func.func @transform_4(%arg0: i32) -> (i32, i32) {
    %c0_i32 = arith.constant 0 : i32
    %c0_i32_0 = arith.constant 0 : i32
    %c0_i32_1 = arith.constant 0 : i32
    return %c0_i32, %c0_i32_0 : i32, i32
  }
  func.func @transform_5(%arg0: i32) -> (i32, i32) {
    %c0_i32 = arith.constant 0 : i32
    %c0_i32_0 = arith.constant 0 : i32
    return %arg0, %c0_i32 : i32, i32
  }
}

</mosaic_0001>

<llo_original>
// kernel: tpu_custom_call.1
$region0: #{tpu_custom_call.1}
  #allocation0 [shape = 'u32[]', space=smem, size = 0x4, offset = 0x4, fixed_abs, tag = 'smem constant byte address 0x4 - core index']
  #allocation1 [shape = 'u32[144,128]{1,0:T(1,128)}', space=vmem, size = 0x12000, scoped, tag = 'internal scratch']
  %s0 = inlined_call_operand.hbm [shape: bf16[128,256], index: 0, kind: input, shape index: {}]
  %s1 = inlined_call_operand.hbm [shape: bf16[256,128], index: 1, kind: input, shape index: {}]
  %s2 = inlined_call_operand.vmem [shape: f32[1,128], index: 2, kind: input, shape index: {}]
  %s3 = inlined_call_operand.hbm [shape: bf16[128,128], index: 3, kind: input, shape index: {}]
  %s4 = inlined_call_operand.vmem [shape: f32[1,128], index: 4, kind: input, shape index: {}]
  %s5 = inlined_call_operand.hbm [shape: f32[128,128], index: 5, kind: output, shape index: {}]
  %s6 = sld [smem:[#allocation0]]
  $region65: #{tpu_custom_call.1} parent=0
    _
  %s8 = ssub.s32 1, %s6
  %s9 = scalar_select 0, %s8, %s6
  $region1: #{tpu_custom_call.1} parent=0
    #allocation2 [shape = 'u8[65536]{0}', space=vmem, size = 0x10000, scoped, tag = 'input window, operand 0']
    #allocation3 [shape = 's32[2]{0}', space=sflag, size = 0x8, scoped, tag = 'scoped memory for tpu_custom_call.1']
    #allocation4 [shape = 's32[2]{0}', space=sflag, size = 0x8, scoped, tag = 'scoped memory for tpu_custom_call.1']
    #allocation5 [shape = 'u8[65536]{0}', space=vmem, size = 0x10000, scoped, tag = 'input window, operand 1, single buffered']
    #allocation6 [shape = 's32[1]{0}', space=sflag, size = 0x4, scoped, tag = 'scoped memory for tpu_custom_call.1']
    #allocation7 [shape = 'u8[32768]{0}', space=vmem, size = 0x8000, scoped, tag = 'input window, operand 3, single buffered']
    #allocation8 [shape = 'u8[65536]{0}', space=vmem, size = 0x10000, scoped, tag = 'output window, operand 0']
    %10 = vsyncpa [#allocation3], 0
    %s11 = scalar_lea.sflag [#allocation3], 1
    %12 = vsyncpa %s11, 0
    %13 = vsyncpa [#allocation6], 0
    %14 = vsyncpa [#allocation4], 0
    %s15 = scalar_lea.sflag [#allocation4], 1
    %16 = vsyncpa %s15, 0
    loop: start=0, step=1, limit=4
    $region2: #{tpu_custom_call.1} parent=1 // loop_pre_header
      _
    $region3: #{tpu_custom_call.1} parent=1 // loop_header
      %s18 = sphi 0, %s22
      %p19 = scmp.ge.s32.totalorder %s18, 4
      %s28 = sphi 0, %s30
      %s31 = sphi 0, %s28
      %s32 = sphi 0, %s31
      %s48 = sphi 0, %s32
      %s52 = sphi 0, %s52
      %s54 = sphi 0, %s52
      %s55 = sphi 0, %s54
      %s69 = sphi 0, %s55
      %s73 = sphi 0, %s73
      %s75 = sphi 0, %s73
      %s76 = sphi 0, %s75
      %s90 = sphi 0, %s76
      %s94 = sphi 0, %s94
      %s96 = sphi 0, %s94
      %s97 = sphi 0, %s96
      %s111 = sphi 0, %s97
      %s115 = sphi 0, %s115
      %s117 = sphi 0, %s115
      %s118 = sphi 0, %s117
      %s132 = sphi 0, %s118
      %s138 = sphi 0, %s140
      %s141 = sphi 0, %s138
      %s142 = sphi 0, %s141
      %s158 = sphi 0, %s142
    $region4: #{tpu_custom_call.1} parent=1 // loop_header_branch
      %21 = sbr.rel (%p19) target = $region8
    $region5: #{tpu_custom_call.1} parent=1 // loop_body
      %s23 = ssub.s32 %s18, 1
      %s24 = ssub.s32 %s18, 2
      %s25 = sadd.s32 %s18, 1
      %s26 = ssub.s32 %s18, %s25
      %p27 = scmp.eq.s32.totalorder %s26, 0
      %s29 = sadd.s32 %s28, 1
      %s30 = scalar_select %p27, %s28, %s29
      %p33 = pneg %p27
      %p34 = scmp.eq.s32.totalorder %s18, 1
      %p35 = por %p33, %p34
      %p36 = scmp.ne.s32.totalorder %s28, %s31
      %p37 = scmp.eq.s32.totalorder %s18, 0
      %p38 = por %p36, %p37
      %p39 = scmp.ne.s32.totalorder %s28, %s31
      %p40 = scmp.eq.s32.totalorder %s23, 1
      %p41 = por %p39, %p40
      %p42 = scmp.ne.s32.totalorder %s31, %s32
      %p43 = scmp.eq.s32.totalorder %s23, 0
      %p44 = por %p42, %p43
      %p45 = scmp.ne.s32.totalorder %s31, %s32
      %p46 = scmp.eq.s32.totalorder %s24, 1
      %p47 = por %p45, %p46
      %p49 = scmp.ne.s32.totalorder %s32, %s48
      %p50 = scmp.eq.s32.totalorder %s24, 0
      %p51 = por %p49, %p50
      %s53 = sadd.s32 %s52, 1
      %p56 = scmp.eq.s32.totalorder %s18, 1
      %p57 = scmp.ne.s32.totalorder %s52, %s54
      %p58 = scmp.eq.s32.totalorder %s18, 0
      %p59 = por %p57, %p58
      %p60 = scmp.ne.s32.totalorder %s52, %s54
      %p61 = scmp.eq.s32.totalorder %s23, 1
      %p62 = por %p60, %p61
      %p63 = scmp.ne.s32.totalorder %s54, %s55
      %p64 = scmp.eq.s32.totalorder %s23, 0
      %p65 = por %p63, %p64
      %p66 = scmp.ne.s32.totalorder %s54, %s55
      %p67 = scmp.eq.s32.totalorder %s24, 1
      %p68 = por %p66, %p67
      %p70 = scmp.ne.s32.totalorder %s55, %s69
      %p71 = scmp.eq.s32.totalorder %s24, 0
      %p72 = por %p70, %p71
      %s74 = sadd.s32 %s73, 1
      %p77 = scmp.eq.s32.totalorder %s18, 1
      %p78 = scmp.ne.s32.totalorder %s73, %s75
      %p79 = scmp.eq.s32.totalorder %s18, 0
      %p80 = por %p78, %p79
      %p81 = scmp.ne.s32.totalorder %s73, %s75
      %p82 = scmp.eq.s32.totalorder %s23, 1
      %p83 = por %p81, %p82
      %p84 = scmp.ne.s32.totalorder %s75, %s76
      %p85 = scmp.eq.s32.totalorder %s23, 0
      %p86 = por %p84, %p85
      %p87 = scmp.ne.s32.totalorder %s75, %s76
      %p88 = scmp.eq.s32.totalorder %s24, 1
      %p89 = por %p87, %p88
      %p91 = scmp.ne.s32.totalorder %s76, %s90
      %p92 = scmp.eq.s32.totalorder %s24, 0
      %p93 = por %p91, %p92
      %s95 = sadd.s32 %s94, 1
      %p98 = scmp.eq.s32.totalorder %s18, 1
      %p99 = scmp.ne.s32.totalorder %s94, %s96
      %p100 = scmp.eq.s32.totalorder %s18, 0
      %p101 = por %p99, %p100
      %p102 = scmp.ne.s32.totalorder %s94, %s96
      %p103 = scmp.eq.s32.totalorder %s23, 1
      %p104 = por %p102, %p103
      %p105 = scmp.ne.s32.totalorder %s96, %s97
      %p106 = scmp.eq.s32.totalorder %s23, 0
      %p107 = por %p105, %p106
      %p108 = scmp.ne.s32.totalorder %s96, %s97
      %p109 = scmp.eq.s32.totalorder %s24, 1
      %p110 = por %p108, %p109
      %p112 = scmp.ne.s32.totalorder %s97, %s111
      %p113 = scmp.eq.s32.totalorder %s24, 0
      %p114 = por %p112, %p113
      %s116 = sadd.s32 %s115, 1
      %p119 = scmp.eq.s32.totalorder %s18, 1
      %p120 = scmp.ne.s32.totalorder %s115, %s117
      %p121 = scmp.eq.s32.totalorder %s18, 0
      %p122 = por %p120, %p121
      %p123 = scmp.ne.s32.totalorder %s115, %s117
      %p124 = scmp.eq.s32.totalorder %s23, 1
      %p125 = por %p123, %p124
      %p126 = scmp.ne.s32.totalorder %s117, %s118
      %p127 = scmp.eq.s32.totalorder %s23, 0
      %p128 = por %p126, %p127
      %p129 = scmp.ne.s32.totalorder %s117, %s118
      %p130 = scmp.eq.s32.totalorder %s24, 1
      %p131 = por %p129, %p130
      %p133 = scmp.ne.s32.totalorder %s118, %s132
      %p134 = scmp.eq.s32.totalorder %s24, 0
      %p135 = por %p133, %p134
      %s136 = ssub.s32 %s18, %s25
      %p137 = scmp.eq.s32.totalorder %s136, 0
      %s139 = sadd.s32 %s138, 1
      %s140 = scalar_select %p137, %s138, %s139
      %p143 = pneg %p137
      %p144 = scmp.eq.s32.totalorder %s18, 1
      %p145 = por %p143, %p144
      %p146 = scmp.ne.s32.totalorder %s138, %s141
      %p147 = scmp.eq.s32.totalorder %s18, 0
      %p148 = por %p146, %p147
      %p149 = scmp.ne.s32.totalorder %s138, %s141
      %p150 = scmp.eq.s32.totalorder %s23, 1
      %p151 = por %p149, %p150
      %p152 = scmp.ne.s32.totalorder %s141, %s142
      %p153 = scmp.eq.s32.totalorder %s23, 0
      %p154 = por %p152, %p153
      %p155 = scmp.ne.s32.totalorder %s141, %s142
      %p156 = scmp.eq.s32.totalorder %s24, 1
      %p157 = por %p155, %p156
      %p159 = scmp.ne.s32.totalorder %s142, %s158
      %p160 = scmp.eq.s32.totalorder %s24, 0
      %p161 = por %p159, %p160
      %p162 = scmp.le.s32.totalorder 1, %s18
      %p163 = scmp.lt.s32.totalorder %s18, 3
      %p164 = pnand %p162, %p163
      %p165 = pneg %p164
      // Predicated region
      $region9: #{tpu_custom_call.1} parent=5 // pred_check
        _
      $region10: #{tpu_custom_call.1} parent=5 // pred_check_branch
        %167 = sbr.rel (%p164) target = $region12
      $region11: #{tpu_custom_call.1} parent=5 // pred_region
        %s168 = ssub.s32 %s18, 1
        // Predicated region
        $region13: #{tpu_custom_call.1} parent=11 // pred_check
          %p169 = pneg %p65
        $region14: #{tpu_custom_call.1} parent=11 // pred_check_branch
          %171 = sbr.rel (%p169) target = $region16
        $region15: #{tpu_custom_call.1} parent=11 // pred_region
          %s173 = ssub.s32 2048, 2048
          %174 = vsyncadd [#allocation6], %s173
          %s175 = sshll.u32 [#allocation5], 4
          %s176 = int_to_ptr.vmem [resolvable:$true] %s175
          %181 = dma.hbm_to_vmem [thread:$0]  %s1, 2048, %s176, [#allocation6], 64, 64, 4
        $region16: #{tpu_custom_call.1} parent=11 // pred_fallthru
          _
        // Predicated region
        $region17: #{tpu_custom_call.1} parent=11 // pred_check
          %p182 = pneg %p86
        $region18: #{tpu_custom_call.1} parent=11 // pred_check_branch
          %184 = sbr.rel (%p182) target = $region20
        $region19: #{tpu_custom_call.1} parent=11 // pred_region
          _
        $region20: #{tpu_custom_call.1} parent=11 // pred_fallthru
          _
        // Predicated region
        $region21: #{tpu_custom_call.1} parent=11 // pred_check
          %p185 = pneg %p107
        $region22: #{tpu_custom_call.1} parent=11 // pred_check_branch
          %187 = sbr.rel (%p185) target = $region24
        $region23: #{tpu_custom_call.1} parent=11 // pred_region
          %s189 = ssub.s32 1024, 1024
          %190 = vsyncadd [#allocation6], %s189
          %s191 = sshll.u32 [#allocation7], 4
          %s192 = int_to_ptr.vmem [resolvable:$true] %s191
          %197 = dma.hbm_to_vmem [thread:$0]  %s3, 1024, %s192, [#allocation6], 64, 64, 4
        $region24: #{tpu_custom_call.1} parent=11 // pred_fallthru
          _
        // Predicated region
        $region25: #{tpu_custom_call.1} parent=11 // pred_check
          %p198 = pneg %p128
        $region26: #{tpu_custom_call.1} parent=11 // pred_check_branch
          %200 = sbr.rel (%p198) target = $region28
        $region27: #{tpu_custom_call.1} parent=11 // pred_region
          _
        $region28: #{tpu_custom_call.1} parent=11 // pred_fallthru
          _
      $region12: #{tpu_custom_call.1} parent=5 // pred_fallthru
        _
      %p201 = scmp.lt.s32.totalorder %s18, 2
      // Predicated region
      $region29: #{tpu_custom_call.1} parent=5 // pred_check
        %p202 = pneg %p201
      $region30: #{tpu_custom_call.1} parent=5 // pred_check_branch
        %204 = sbr.rel (%p202) target = $region32
      $region31: #{tpu_custom_call.1} parent=5 // pred_region
        // Predicated region
        $region33: #{tpu_custom_call.1} parent=31 // pred_check
          %p205 = pneg %p38
        $region34: #{tpu_custom_call.1} parent=31 // pred_check_branch
          %207 = sbr.rel (%p205) target = $region36
        $region35: #{tpu_custom_call.1} parent=31 // pred_region
          %s208 = sand.u32 %s28, 1
          %s209 = scalar_lea.sflag [#allocation3], %s208
          %s210 = sand.u32 %s28, 1
          %s211 = smul.addr %s210, 64
          %s212 = scalar_lea.vmem [#allocation2], %s211
          %s213 = smul.u32 8, %s18
          %s215 = ssub.s32 1024, 1024
          %216 = vsyncadd %s209, %s215
          %s217 = smul.addr %s213, 2
          %s218 = smul.addr %s217, 64
          %s219 = scalar_lea.hbm %s0, %s218
          %s220 = sshll.u32 %s212, 4
          %s221 = int_to_ptr.vmem [resolvable:$true] %s220
          %226 = dma.hbm_to_vmem [thread:$0]  %s219, 1024, %s221, %s209, 128, 128, 8
        $region36: #{tpu_custom_call.1} parent=31 // pred_fallthru
          _
      $region32: #{tpu_custom_call.1} parent=5 // pred_fallthru
        _
      %p227 = scmp.le.s32.totalorder 1, %s18
      %p228 = scmp.lt.s32.totalorder %s18, 3
      %p229 = pnand %p227, %p228
      %p230 = pneg %p229
      // Predicated region
      $region37: #{tpu_custom_call.1} parent=5 // pred_check
        _
      $region38: #{tpu_custom_call.1} parent=5 // pred_check_branch
        %232 = sbr.rel (%p229) target = $region40
      $region39: #{tpu_custom_call.1} parent=5 // pred_region
        %s233 = ssub.s32 %s18, 1
        %s234 = sand.u32 %s31, 1
        %s235 = scalar_lea.sflag [#allocation3], %s234
        %s236 = sand.u32 %s31, 1
        %s237 = smul.addr %s236, 64
        %s238 = scalar_lea.vmem [#allocation2], %s237
        // Predicated region
        $region41: #{tpu_custom_call.1} parent=39 // pred_check
          %p239 = pneg %p44
        $region42: #{tpu_custom_call.1} parent=39 // pred_check_branch
          %241 = sbr.rel (%p239) target = $region44
        $region43: #{tpu_custom_call.1} parent=39 // pred_region
          %242 = dma.done %s235, 1024
        $region44: #{tpu_custom_call.1} parent=39 // pred_fallthru
          _
        // Predicated region
        $region45: #{tpu_custom_call.1} parent=39 // pred_check
          %p243 = pneg %p65
        $region46: #{tpu_custom_call.1} parent=39 // pred_check_branch
          %245 = sbr.rel (%p243) target = $region48
        $region47: #{tpu_custom_call.1} parent=39 // pred_region
          %246 = dma.done [#allocation6], 2048
        $region48: #{tpu_custom_call.1} parent=39 // pred_fallthru
          _
        // Predicated region
        $region49: #{tpu_custom_call.1} parent=39 // pred_check
          %p247 = pneg %p107
        $region50: #{tpu_custom_call.1} parent=39 // pred_check_branch
          %249 = sbr.rel (%p247) target = $region52
        $region51: #{tpu_custom_call.1} parent=39 // pred_region
          %250 = dma.done [#allocation6], 1024
        $region52: #{tpu_custom_call.1} parent=39 // pred_fallthru
          _
        %s251 = sand.u32 %s31, 1
        %s252 = scalar_lea.sflag [#allocation3], %s251
        %s253 = sand.u32 %s31, 1
        %s254 = smul.addr %s253, 64
        %s255 = scalar_lea.vmem [#allocation2], %s254
        %p256 = pneg %p44
        %p257 = pneg %p41
        %p258 = pneg %p65
        %p259 = pneg %p62
        %p260 = pneg %p86
        %p261 = pneg %p83
        %p262 = pneg %p107
        %p263 = pneg %p104
        %p264 = pneg %p128
        %p265 = pneg %p125
        %p266 = pneg %p154
        %p267 = pneg %p151
        %s268 = sand.u32 %s141, 1
        %s269 = scalar_lea.sflag [#allocation4], %s268
        %s270 = sand.u32 %s141, 1
        %s271 = smul.addr %s270, 64
        %s272 = scalar_lea.vmem [#allocation8], %s271
        %s273 = smul.u32 8, %s23
        %s274 = smul.u32 8, %s23
        %v276 = vld [vmem:[%s238] sm:$0xff]
        %v277 = vld [vmem:[%s238 + $0x8] sm:$0xff]
        %v278 = vld [vmem:[%s238 + $0x10] sm:$0xff]
        %v279 = vld [vmem:[%s238 + $0x18] sm:$0xff]
        %v280 = vld [vmem:[%s238 + $0x20] sm:$0xff]
        %v281 = vld [vmem:[%s238 + $0x28] sm:$0xff]
        %v282 = vld [vmem:[%s238 + $0x30] sm:$0xff]
        %v283 = vld [vmem:[%s238 + $0x38] sm:$0xff]
        %v284 = vld [vmem:[#allocation5] sm:$0xf]
        %v285 = vld [vmem:[#allocation5 + $0x4] sm:$0xf]
        %v286 = vld [vmem:[#allocation5 + $0x8] sm:$0xf]
        %v287 = vld [vmem:[#allocation5 + $0xc] sm:$0xf]
        %v288 = vld [vmem:[#allocation5 + $0x10] sm:$0xf]
        %v289 = vld [vmem:[#allocation5 + $0x14] sm:$0xf]
        %v290 = vld [vmem:[#allocation5 + $0x18] sm:$0xf]
        %v291 = vld [vmem:[#allocation5 + $0x1c] sm:$0xf]
        %v292 = vld [vmem:[#allocation5 + $0x20] sm:$0xf]
        %v293 = vld [vmem:[#allocation5 + $0x24] sm:$0xf]
        %v294 = vld [vmem:[#allocation5 + $0x28] sm:$0xf]
        %v295 = vld [vmem:[#allocation5 + $0x2c] sm:$0xf]
        %v296 = vld [vmem:[#allocation5 + $0x30] sm:$0xf]
        %v297 = vld [vmem:[#allocation5 + $0x34] sm:$0xf]
        %v298 = vld [vmem:[#allocation5 + $0x38] sm:$0xf]
        %v299 = vld [vmem:[#allocation5 + $0x3c] sm:$0xf]
        %v300 = vld [vmem:[#allocation5 + $0x40] sm:$0xf]
        %v301 = vld [vmem:[#allocation5 + $0x44] sm:$0xf]
        %v302 = vld [vmem:[#allocation5 + $0x48] sm:$0xf]
        %v303 = vld [vmem:[#allocation5 + $0x4c] sm:$0xf]
        %v304 = vld [vmem:[#allocation5 + $0x50] sm:$0xf]
        %v305 = vld [vmem:[#allocation5 + $0x54] sm:$0xf]
        %v306 = vld [vmem:[#allocation5 + $0x58] sm:$0xf]
        %v307 = vld [vmem:[#allocation5 + $0x5c] sm:$0xf]
        %v308 = vld [vmem:[#allocation5 + $0x60] sm:$0xf]
        %v309 = vld [vmem:[#allocation5 + $0x64] sm:$0xf]
        %v310 = vld [vmem:[#allocation5 + $0x68] sm:$0xf]
        %v311 = vld [vmem:[#allocation5 + $0x6c] sm:$0xf]
        %v312 = vld [vmem:[#allocation5 + $0x70] sm:$0xf]
        %v313 = vld [vmem:[#allocation5 + $0x74] sm:$0xf]
        %v314 = vld [vmem:[#allocation5 + $0x78] sm:$0xf]
        %v315 = vld [vmem:[#allocation5 + $0x7c] sm:$0xf]
        %v316 = vld [vmem:[%s2] sm:$0x1]
        %v318 = vlaneseq
        %v319 = vshrl.u32 %v318, 7
        %v320 = vsub.s32 0, %v319
        %v321 = vrot.slane %v316, %v320
        %v331 = vunpack.c.l.b16 %v276
        %v332 = vunpack.c.h.b16 %v276
        %v333 = vunpack.c.l.b16 %v277
        %v334 = vunpack.c.h.b16 %v277
        %v335 = vunpack.c.l.b16 %v278
        %v336 = vunpack.c.h.b16 %v278
        %v337 = vunpack.c.l.b16 %v279
        %v338 = vunpack.c.h.b16 %v279
        %v339 = vunpack.c.l.b16 %v280
        %v340 = vunpack.c.h.b16 %v280
        %v341 = vunpack.c.l.b16 %v281
        %v342 = vunpack.c.h.b16 %v281
        %v343 = vunpack.c.l.b16 %v282
        %v344 = vunpack.c.h.b16 %v282
        %v345 = vunpack.c.l.b16 %v283
        %v346 = vunpack.c.h.b16 %v283
        %v347 = vpack.c.b16 %v333, %v331
        %v348 = vpack.c.b16 %v334, %v332
        %v349 = vpack.c.b16 %v337, %v335
        %v350 = vpack.c.b16 %v338, %v336
        %v351 = vpack.c.b16 %v341, %v339
        %v352 = vpack.c.b16 %v342, %v340
        %v353 = vpack.c.b16 %v345, %v343
        %v354 = vpack.c.b16 %v346, %v344
        %v395 = vunpack.c.l.b16 %v284
        %v396 = vunpack.c.l.b16 %v285
        %v397 = vunpack.c.l.b16 %v286
        %v398 = vunpack.c.l.b16 %v287
        %v399 = vunpack.c.l.b16 %v288
        %v400 = vunpack.c.l.b16 %v289
        %v401 = vunpack.c.l.b16 %v290
        %v402 = vunpack.c.l.b16 %v291
        %v403 = vunpack.c.l.b16 %v292
        %v404 = vunpack.c.l.b16 %v293
        %v405 = vunpack.c.l.b16 %v294
        %v406 = vunpack.c.l.b16 %v295
        %v407 = vunpack.c.l.b16 %v296
        %v408 = vunpack.c.l.b16 %v297
        %v409 = vunpack.c.l.b16 %v298
        %v410 = vunpack.c.l.b16 %v299
        %v411 = vunpack.c.l.b16 %v300
        %v412 = vunpack.c.l.b16 %v301
        %v413 = vunpack.c.l.b16 %v302
        %v414 = vunpack.c.l.b16 %v303
        %v415 = vunpack.c.l.b16 %v304
        %v416 = vunpack.c.l.b16 %v305
        %v417 = vunpack.c.l.b16 %v306
        %v418 = vunpack.c.l.b16 %v307
        %v419 = vunpack.c.l.b16 %v308
        %v420 = vunpack.c.l.b16 %v309
        %v421 = vunpack.c.l.b16 %v310
        %v422 = vunpack.c.l.b16 %v311
        %v423 = vunpack.c.l.b16 %v312
        %v424 = vunpack.c.l.b16 %v313
        %v425 = vunpack.c.l.b16 %v314
        %v426 = vunpack.c.l.b16 %v315
        %v427 = vpack.c.b16 %v396, %v395
        %v428 = vpack.c.b16 %v398, %v397
        %v429 = vpack.c.b16 %v400, %v399
        %v430 = vpack.c.b16 %v402, %v401
        %v431 = vpack.c.b16 %v404, %v403
        %v432 = vpack.c.b16 %v406, %v405
        %v433 = vpack.c.b16 %v408, %v407
        %v434 = vpack.c.b16 %v410, %v409
        %v435 = vpack.c.b16 %v412, %v411
        %v436 = vpack.c.b16 %v414, %v413
        %v437 = vpack.c.b16 %v416, %v415
        %v438 = vpack.c.b16 %v418, %v417
        %v439 = vpack.c.b16 %v420, %v419
        %v440 = vpack.c.b16 %v422, %v421
        %v441 = vpack.c.b16 %v424, %v423
        %v442 = vpack.c.b16 %v426, %v425
        %459 = vmatprep.subr.bf16.mxu0 0
        %460 = vmatpush1.bf16.msra.mxu0 %v427
        %461 = vmatprep.subr.bf16.mxu0 0
        %462 = vmatpush1.bf16.msra.mxu0 %v428
        %463 = vmatprep.subr.bf16.mxu0 0
        %464 = vmatpush1.bf16.msra.mxu0 %v429
        %465 = vmatprep.subr.bf16.mxu0 0
        %466 = vmatpush1.bf16.msra.mxu0 %v430
        %467 = vmatprep.subr.bf16.mxu0 0
        %468 = vmatpush1.bf16.msra.mxu0 %v431
        %469 = vmatprep.subr.bf16.mxu0 0
        %470 = vmatpush1.bf16.msra.mxu0 %v432
        %471 = vmatprep.subr.bf16.mxu0 0
        %472 = vmatpush1.bf16.msra.mxu0 %v433
        %473 = vmatprep.subr.bf16.mxu0 0
        %474 = vmatpush1.bf16.msra.mxu0 %v434
        %475 = vmatprep.subr.bf16.mxu0 0
        %476 = vmatpush1.bf16.msra.mxu0 %v435
        %477 = vmatprep.subr.bf16.mxu0 0
        %478 = vmatpush1.bf16.msra.mxu0 %v436
        %479 = vmatprep.subr.bf16.mxu0 0
        %480 = vmatpush1.bf16.msra.mxu0 %v437
        %481 = vmatprep.subr.bf16.mxu0 0
        %482 = vmatpush1.bf16.msra.mxu0 %v438
        %483 = vmatprep.subr.bf16.mxu0 0
        %484 = vmatpush1.bf16.msra.mxu0 %v439
        %485 = vmatprep.subr.bf16.mxu0 0
        %486 = vmatpush1.bf16.msra.mxu0 %v440
        %487 = vmatprep.subr.bf16.mxu0 0
        %488 = vmatpush1.bf16.msra.mxu0 %v441
        %489 = vmatprep.subr.bf16.mxu0 0
        %490 = vmatpush1.bf16.msra.mxu0 %v442
        %491 = vmatprep.mubr.bf16.mxu0 %v348
        %492 = vmatmul.mubr.bf16.gmra.mrb[0].mxu0 %v347
        %v493 = vpop.f32.mrb[0].mxu0
        %v494 = vadd.f32 %v321, %v493
        %v495 = vpop.f32.mrb[0].mxu0
        %v496 = vpop.f32.mrb[0].mxu0
        %v497 = vadd.f32 %v321, %v496
        %v498 = vpop.f32.mrb[0].mxu0
        %499 = vmatprep.mubr.bf16.mxu0 %v350
        %500 = vmatmul.mubr.bf16.gmra.mrb[0].mxu0 %v349
        %v501 = vpop.f32.mrb[0].mxu0
        %v502 = vadd.f32 %v321, %v501
        %v503 = vpop.f32.mrb[0].mxu0
        %v504 = vpop.f32.mrb[0].mxu0
        %v505 = vadd.f32 %v321, %v504
        %v506 = vpop.f32.mrb[0].mxu0
        %507 = vmatprep.mubr.bf16.mxu0 %v352
        %508 = vmatmul.mubr.bf16.gmra.mrb[0].mxu0 %v351
        %v509 = vpop.f32.mrb[0].mxu0
        %v510 = vadd.f32 %v321, %v509
        %v511 = vpop.f32.mrb[0].mxu0
        %v512 = vpop.f32.mrb[0].mxu0
        %v513 = vadd.f32 %v321, %v512
        %v514 = vpop.f32.mrb[0].mxu0
        %515 = vmatprep.mubr.bf16.mxu0 %v354
        %516 = vmatmul.mubr.bf16.gmra.mrb[0].mxu0 %v353
        %v517 = vpop.f32.mrb[0].mxu0
        %v518 = vadd.f32 %v321, %v517
        %v519 = vpop.f32.mrb[0].mxu0
        %v520 = vpop.f32.mrb[0].mxu0
        %v521 = vadd.f32 %v321, %v520
        %v522 = vpop.f32.mrb[0].mxu0
        %523 = vdwg.mxu0
        %v524 = vmax.f32 %v494, 0.0
        %v525 = vmax.f32 %v497, 0.0
        %v526 = vmax.f32 %v502, 0.0
        %v527 = vmax.f32 %v505, 0.0
        %v528 = vmax.f32 %v510, 0.0
        %v529 = vmax.f32 %v513, 0.0
        %v530 = vmax.f32 %v518, 0.0
        %v531 = vmax.f32 %v521, 0.0
        %v532 = vpack.c.bf16 %v525, %v524
        %v533 = vpack.c.bf16 %v527, %v526
        %v534 = vpack.c.bf16 %v529, %v528
        %v535 = vpack.c.bf16 %v531, %v530
        %v536 = vld [vmem:[#allocation7] sm:$0xf]
        %v537 = vld [vmem:[#allocation7 + $0x4] sm:$0xf]
        %v538 = vld [vmem:[#allocation7 + $0x8] sm:$0xf]
        %v539 = vld [vmem:[#allocation7 + $0xc] sm:$0xf]
        %v540 = vld [vmem:[#allocation7 + $0x10] sm:$0xf]
        %v541 = vld [vmem:[#allocation7 + $0x14] sm:$0xf]
        %v542 = vld [vmem:[#allocation7 + $0x18] sm:$0xf]
        %v543 = vld [vmem:[#allocation7 + $0x1c] sm:$0xf]
        %v544 = vld [vmem:[#allocation7 + $0x20] sm:$0xf]
        %v545 = vld [vmem:[#allocation7 + $0x24] sm:$0xf]
        %v546 = vld [vmem:[#allocation7 + $0x28] sm:$0xf]
        %v547 = vld [vmem:[#allocation7 + $0x2c] sm:$0xf]
        %v548 = vld [vmem:[#allocation7 + $0x30] sm:$0xf]
        %v549 = vld [vmem:[#allocation7 + $0x34] sm:$0xf]
        %v550 = vld [vmem:[#allocation7 + $0x38] sm:$0xf]
        %v551 = vld [vmem:[#allocation7 + $0x3c] sm:$0xf]
        %v552 = vld [vmem:[%s4] sm:$0x1]
        %v554 = vlaneseq
        %v555 = vshrl.u32 %v554, 7
        %v556 = vsub.s32 0, %v555
        %v557 = vrot.slane %v552, %v556
        %v575 = vunpack.c.l.b16 %v536
        %v576 = vunpack.c.l.b16 %v537
        %v577 = vunpack.c.l.b16 %v538
        %v578 = vunpack.c.l.b16 %v539
        %v579 = vunpack.c.l.b16 %v540
        %v580 = vunpack.c.l.b16 %v541
        %v581 = vunpack.c.l.b16 %v542
        %v582 = vunpack.c.l.b16 %v543
        %v583 = vunpack.c.l.b16 %v544
        %v584 = vunpack.c.l.b16 %v545
        %v585 = vunpack.c.l.b16 %v546
        %v586 = vunpack.c.l.b16 %v547
        %v587 = vunpack.c.l.b16 %v548
        %v588 = vunpack.c.l.b16 %v549
        %v589 = vunpack.c.l.b16 %v550
        %v590 = vunpack.c.l.b16 %v551
        %v591 = vpack.c.b16 %v576, %v575
        %v592 = vpack.c.b16 %v578, %v577
        %v593 = vpack.c.b16 %v580, %v579
        %v594 = vpack.c.b16 %v582, %v581
        %v595 = vpack.c.b16 %v584, %v583
        %v596 = vpack.c.b16 %v586, %v585
        %v597 = vpack.c.b16 %v588, %v587
        %v598 = vpack.c.b16 %v590, %v589
        %607 = vmatprep.subr.bf16.mxu0 0
        %608 = vmatpush1.bf16.msra.mxu0 %v591
        %609 = vmatprep.subr.bf16.mxu0 0
        %610 = vmatpush1.bf16.msra.mxu0 %v592
        %611 = vmatprep.subr.bf16.mxu0 0
        %612 = vmatpush1.bf16.msra.mxu0 %v593
        %613 = vmatprep.subr.bf16.mxu0 0
        %614 = vmatpush1.bf16.msra.mxu0 %v594
        %615 = vmatprep.subr.bf16.mxu0 0
        %616 = vmatpush1.bf16.msra.mxu0 %v595
        %617 = vmatprep.subr.bf16.mxu0 0
        %618 = vmatpush1.bf16.msra.mxu0 %v596
        %619 = vmatprep.subr.bf16.mxu0 0
        %620 = vmatpush1.bf16.msra.mxu0 %v597
        %621 = vmatprep.subr.bf16.mxu0 0
        %622 = vmatpush1.bf16.msra.mxu0 %v598
        %623 = vmatprep.subr.bf16.mxu0 0
        %624 = vmatpush1.bf16.msra.mxu0 0
        %625 = vmatprep.subr.bf16.mxu0 0
        %626 = vmatpush1.bf16.msra.mxu0 0
        %627 = vmatprep.subr.bf16.mxu0 0
        %628 = vmatpush1.bf16.msra.mxu0 0
        %629 = vmatprep.subr.bf16.mxu0 0
        %630 = vmatpush1.bf16.msra.mxu0 0
        %631 = vmatprep.subr.bf16.mxu0 0
        %632 = vmatpush1.bf16.msra.mxu0 0
        %633 = vmatprep.subr.bf16.mxu0 0
        %634 = vmatpush1.bf16.msra.mxu0 0
        %635 = vmatprep.subr.bf16.mxu0 0
        %636 = vmatpush1.bf16.msra.mxu0 0
        %637 = vmatprep.subr.bf16.mxu0 0
        %638 = vmatpush1.bf16.msra.mxu0 0
        %639 = vmatprep.mubr.bf16.mxu0 0
        %640 = vmatmul.mubr.bf16.gmra.mrb[0].mxu0 %v532
        %v641 = vpop.f32.mrb[0].mxu0
        %v642 = vadd.f32 %v557, %v641
        %v643 = vpop.f32.mrb[0].mxu0
        %v644 = vpop.f32.mrb[0].mxu0
        %v645 = vadd.f32 %v557, %v644
        %v646 = vpop.f32.mrb[0].mxu0
        %647 = vmatprep.mubr.bf16.mxu0 0
        %648 = vmatmul.mubr.bf16.gmra.mrb[0].mxu0 %v533
        %v649 = vpop.f32.mrb[0].mxu0
        %v650 = vadd.f32 %v557, %v649
        %v651 = vpop.f32.mrb[0].mxu0
        %v652 = vpop.f32.mrb[0].mxu0
        %v653 = vadd.f32 %v557, %v652
        %v654 = vpop.f32.mrb[0].mxu0
        %655 = vmatprep.mubr.bf16.mxu0 0
        %656 = vmatmul.mubr.bf16.gmra.mrb[0].mxu0 %v534
        %v657 = vpop.f32.mrb[0].mxu0
        %v658 = vadd.f32 %v557, %v657
        %v659 = vpop.f32.mrb[0].mxu0
        %v660 = vpop.f32.mrb[0].mxu0
        %v661 = vadd.f32 %v557, %v660
        %v662 = vpop.f32.mrb[0].mxu0
        %663 = vmatprep.mubr.bf16.mxu0 0
        %664 = vmatmul.mubr.bf16.gmra.mrb[0].mxu0 %v535
        %v665 = vpop.f32.mrb[0].mxu0
        %v666 = vadd.f32 %v557, %v665
        %v667 = vpop.f32.mrb[0].mxu0
        %v668 = vpop.f32.mrb[0].mxu0
        %v669 = vadd.f32 %v557, %v668
        %v670 = vpop.f32.mrb[0].mxu0
        %671 = vdwg.mxu0
        %672 = vst [vmem:[%s272] sm:$0xff] %v642
        %673 = vst [vmem:[%s272 + $0x8] sm:$0xff] %v645
        %674 = vst [vmem:[%s272 + $0x10] sm:$0xff] %v650
        %675 = vst [vmem:[%s272 + $0x18] sm:$0xff] %v653
        %676 = vst [vmem:[%s272 + $0x20] sm:$0xff] %v658
        %677 = vst [vmem:[%s272 + $0x28] sm:$0xff] %v661
        %678 = vst [vmem:[%s272 + $0x30] sm:$0xff] %v666
        %679 = vst [vmem:[%s272 + $0x38] sm:$0xff] %v669
        %s680 = sand.u32 %s141, 1
        %s681 = scalar_lea.sflag [#allocation4], %s680
        %s682 = sand.u32 %s141, 1
        %s683 = smul.addr %s682, 64
        %s684 = scalar_lea.vmem [#allocation8], %s683
        // Predicated region
        $region53: #{tpu_custom_call.1} parent=39 // pred_check
          %p685 = pneg %p151
        $region54: #{tpu_custom_call.1} parent=39 // pred_check_branch
          %687 = sbr.rel (%p685) target = $region56
        $region55: #{tpu_custom_call.1} parent=39 // pred_region
          %s688 = smul.u32 8, %s23
          %s690 = ssub.s32 1024, 1024
          %691 = vsyncadd %s681, %s690
          %s692 = smul.addr %s688, 128
          %s693 = scalar_lea.hbm %s5, %s692
          %s694 = sshll.u32 %s684, 4
          %s695 = int_to_ptr.vmem [resolvable:$true] %s694
          %700 = dma.vmem_to_hbm [thread:$0]  %s695, 1024, %s693, %s681, 128, 128, 8
        $region56: #{tpu_custom_call.1} parent=39 // pred_fallthru
          _
      $region40: #{tpu_custom_call.1} parent=5 // pred_fallthru
        _
      %p701 = scmp.le.s32.totalorder 2, %s18
      // Predicated region
      $region57: #{tpu_custom_call.1} parent=5 // pred_check
        %p702 = pneg %p701
      $region58: #{tpu_custom_call.1} parent=5 // pred_check_branch
        %704 = sbr.rel (%p702) target = $region60
      $region59: #{tpu_custom_call.1} parent=5 // pred_region
        %s705 = ssub.s32 %s18, 2
        // Predicated region
        $region61: #{tpu_custom_call.1} parent=59 // pred_check
          %p706 = pneg %p157
        $region62: #{tpu_custom_call.1} parent=59 // pred_check_branch
          %708 = sbr.rel (%p706) target = $region64
        $region63: #{tpu_custom_call.1} parent=59 // pred_region
          %s709 = sand.u32 %s142, 1
          %s710 = scalar_lea.sflag [#allocation4], %s709
          %s711 = sand.u32 %s142, 1
          %s712 = smul.addr %s711, 64
          %s713 = scalar_lea.vmem [#allocation8], %s712
          %714 = dma.done %s710, 1024
        $region64: #{tpu_custom_call.1} parent=59 // pred_fallthru
          _
      $region60: #{tpu_custom_call.1} parent=5 // pred_fallthru
        _
    $region6: #{tpu_custom_call.1} parent=1 // loop_footer
      %s22 = sadd.s32 1, %s18
    $region7: #{tpu_custom_call.1} parent=1 // loop_footer_branch
      %17 = sbr.rel target = $region3
    $region8: #{tpu_custom_call.1} parent=1 // loop_exit
      _
    %715 = vsyncpa [#allocation3], 1
    %s716 = scalar_lea.sflag [#allocation3], 1
    %717 = vsyncpa %s716, 1
    %718 = vsyncpa [#allocation6], 1
    %719 = vsyncpa [#allocation4], 1
    %s720 = scalar_lea.sflag [#allocation4], 1
    %721 = vsyncpa %s720, 1

</llo_original>
